<compile_context>
chip_gen: v6e
topology: v6e:2x2x1
jax: 0.10.0
libtpu: 0.0.40
codegen_flags: <defaults>
</compile_context>

<pallas_src>
import functools

import jax
import jax.numpy as jnp
from jax.experimental import pallas as pl
from jax.experimental.pallas import tpu as pltpu


def _residual_ln_kernel(x_ref, w_ref, b_ref, gamma_ref, beta_ref, u_ref, o_ref,
                        *, dropout_p, eps):
    # sublayer(x): Linear(D, D).  Native-dtype operands -> MXU, f32 accumulate.
    x = x_ref[...]                                                     # (TILE_N, D)
    sub = jnp.dot(x, w_ref[...], preferred_element_type=jnp.float32)  # (TILE_N, D) f32
    sub = sub + b_ref[...].astype(jnp.float32)                        # (1, D) broadcast

    # Inverted dropout (training-mode semantics).  u in [0,1) is supplied per
    # element from outside; keep-test + rescale fused into one select.
    if dropout_p > 0.0:
        keep_prob = 1.0 - dropout_p
        keep = u_ref[...] < jnp.float32(keep_prob)
        sub = jnp.where(keep, sub * (1.0 / keep_prob), 0.0)

    # Residual connection + LayerNorm over last dim (biased variance, eps inside
    # rsqrt), affine gamma/beta.  Elementwise math in f32.
    y = x.astype(jnp.float32) + sub
    mean = jnp.mean(y, axis=-1, keepdims=True)
    var = jnp.mean(jnp.square(y - mean), axis=-1, keepdims=True)
    y_hat = (y - mean) * jax.lax.rsqrt(var + eps)
    out = y_hat * gamma_ref[...].astype(jnp.float32) + beta_ref[...].astype(jnp.float32)

    o_ref[...] = out.astype(o_ref.dtype)


def residual_connection(x2d, w, b, gamma, beta, u, *, dropout_p=0.1, eps=1e-5,
                        tile_n=256):
    """Fused LayerNorm(x + Dropout(x @ w + b)).

    x2d:   (N, D) rows (batch*seq flattened)
    w:     (D, D) sublayer (Linear) weight, laid out so sublayer(x) = x @ w
    b, gamma, beta: (1, D)
    u:     (N, D) uniform [0,1) randoms for the dropout mask
    """
    N, D = x2d.shape
    dtype = x2d.dtype

    # Row tile: big enough to amortize per-step pipeline overhead, bounded so
    # double-buffered x/u/out tiles plus the resident (D, D) weight fit VMEM.
    tile_n = min(tile_n, N)
    n_tiles = pl.cdiv(N, tile_n)
    n_pad = n_tiles * tile_n
    if n_pad != N:
        pad = n_pad - N
        x2d = jnp.pad(x2d, ((0, pad), (0, 0)))
        u = jnp.pad(u, ((0, pad), (0, 0)))

    kernel = functools.partial(_residual_ln_kernel, dropout_p=dropout_p, eps=eps)

    itemsize = jnp.dtype(dtype).itemsize
    cost = pl.CostEstimate(
        flops=2 * n_pad * D * D + 8 * n_pad * D,
        transcendentals=n_pad,  # rsqrt per row
        bytes_accessed=(2 * n_pad * D * itemsize        # x in, out
                        + n_pad * D * 4                 # dropout uniforms
                        + D * D * jnp.dtype(w.dtype).itemsize
                        + 4 * D * 4),                   # b, gamma, beta (+slack)
    )

    out = pl.pallas_call(
        kernel,
        out_shape=jax.ShapeDtypeStruct((n_pad, D), dtype),
        grid=(n_tiles,),
        in_specs=[
            pl.BlockSpec((tile_n, D), lambda i: (i, 0)),   # x  (pipelined rows)
            pl.BlockSpec((D, D), lambda i: (0, 0)),        # sublayer weight (resident)
            pl.BlockSpec((1, D), lambda i: (0, 0)),        # sublayer bias
            pl.BlockSpec((1, D), lambda i: (0, 0)),        # LN gamma
            pl.BlockSpec((1, D), lambda i: (0, 0)),        # LN beta
            pl.BlockSpec((tile_n, D), lambda i: (i, 0)),   # dropout uniforms
        ],
        out_specs=pl.BlockSpec((tile_n, D), lambda i: (i, 0)),
        compiler_params=pltpu.CompilerParams(
            # Rows are independent -> shard the grid across v7x's 2 TensorCores;
            # neutral on v5e/v6e.
            dimension_semantics=("parallel",),
            # Raise the conservative 32 MiB scoped default; stays below v7x's
            # 64 MiB physical VMEM.  For very large D, additionally tile K.
            vmem_limit_bytes=48 * 1024 * 1024,
        ),
        cost_estimate=cost,
    )(x2d, w, b, gamma, beta, u)

    return out[:N]


if __name__ == "__main__":
    batch, seq, dim = 2, 8, 32
    dropout_p = 0.1
    eps = 1e-5

    key = jax.random.PRNGKey(0)
    k1, k2, k3, k4 = jax.random.split(key, 4)

    x = jax.random.normal(k1, (batch, seq, dim), dtype=jnp.float32)
    # deterministic sublayer (Linear) params
    w = jax.random.normal(k2, (dim, dim), dtype=jnp.float32) * (1.0 / jnp.sqrt(dim))
    b = jax.random.normal(k3, (1, dim), dtype=jnp.float32) * 0.01
    # LayerNorm params (torch default init)
    gamma = jnp.ones((1, dim), jnp.float32)
    beta = jnp.zeros((1, dim), jnp.float32)

    x2d = x.reshape(batch * seq, dim)
    # dropout randoms (training mode). TODO(synk): torch uses its own RNG stream;
    # mask values differ from torch, inverted-dropout semantics match.
    u = jax.random.uniform(k4, (batch * seq, dim), dtype=jnp.float32)

    # Sanity check of the fused math on the deterministic path (dropout disabled).
    out_nodrop = residual_connection(x2d, w, b, gamma, beta, u,
                                     dropout_p=0.0, eps=eps)
    y_ref = x2d + (x2d @ w + b)
    mu = y_ref.mean(-1, keepdims=True)
    var = ((y_ref - mu) ** 2).mean(-1, keepdims=True)
    ref = (y_ref - mu) / jnp.sqrt(var + eps) * gamma + beta
    assert jnp.allclose(out_nodrop, ref, atol=1e-5, rtol=1e-5), "mismatch vs reference"

    # Forward with the module's dropout active (training-mode semantics).
    out = residual_connection(x2d, w, b, gamma, beta, u,
                              dropout_p=dropout_p, eps=eps)
    out = out.reshape(batch, seq, dim)
    jax.block_until_ready(out)
    assert out.shape == (batch, seq, dim)
    assert bool(jnp.all(jnp.isfinite(out)))
    print("KERNEL_OK")
</pallas_src>

<mosaic_0001>
module attributes {stable_mosaic.version = 11 : i64} {
  func.func @_residual_ln_kernel(%arg0: i32, %arg1: memref<16x32xf32, #tpu.memory_space<vmem>>, %arg2: memref<32x32xf32, #tpu.memory_space<vmem>>, %arg3: memref<1x32xf32, #tpu.memory_space<vmem>>, %arg4: memref<1x32xf32, #tpu.memory_space<vmem>>, %arg5: memref<1x32xf32, #tpu.memory_space<vmem>>, %arg6: memref<16x32xf32, #tpu.memory_space<vmem>>, %arg7: memref<16x32xf32, #tpu.memory_space<vmem>>) attributes {dimension_semantics = [#tpu.dimension_semantics<parallel>], iteration_bounds = array<i64: 1>, scalar_prefetch = 0 : i64, scratch_operands = 0 : i64, tpu.core_type = #tpu.core_type<tc>, window_params = [{transform_indices = @transform_0, window_bounds = array<i64: 16, 32>}, {pipeline_mode = #tpu.pipeline_mode<synchronous>, transform_indices = @transform_1, window_bounds = array<i64: 32, 32>}, {pipeline_mode = #tpu.pipeline_mode<synchronous>, transform_indices = @transform_2, window_bounds = array<i64: 1, 32>}, {pipeline_mode = #tpu.pipeline_mode<synchronous>, transform_indices = @transform_3, window_bounds = array<i64: 1, 32>}, {pipeline_mode = #tpu.pipeline_mode<synchronous>, transform_indices = @transform_4, window_bounds = array<i64: 1, 32>}, {transform_indices = @transform_5, window_bounds = array<i64: 16, 32>}, {transform_indices = @transform_6, window_bounds = array<i64: 16, 32>}]} {
    %c0 = arith.constant 0 : index
    %c0_0 = arith.constant 0 : index
    %0 = vector.load %arg1[%c0, %c0_0] : memref<16x32xf32, #tpu.memory_space<vmem>>, vector<16x32xf32>
    %c0_1 = arith.constant 0 : index
    %c0_2 = arith.constant 0 : index
    %1 = vector.load %arg2[%c0_1, %c0_2] : memref<32x32xf32, #tpu.memory_space<vmem>>, vector<32x32xf32>
    %cst = arith.constant dense<0.000000e+00> : vector<16x32xf32>
    %2 = tpu.matmul %0, %1, %cst {dimension_numbers = #tpu.dot_dimension_numbers<[1], [0], [0], [1], [0, 0, 1, 1], [], []>} : vector<16x32xf32>, vector<32x32xf32>, vector<16x32xf32> -> vector<16x32xf32>
    %c0_3 = arith.constant 0 : index
    %c0_4 = arith.constant 0 : index
    %3 = vector.load %arg3[%c0_3, %c0_4] : memref<1x32xf32, #tpu.memory_space<vmem>>, vector<1x32xf32>
    %4 = vector.broadcast %3 : vector<1x32xf32> to vector<16x32xf32>
    %5 = arith.addf %2, %4 : vector<16x32xf32>
    %6 = arith.addf %0, %5 : vector<16x32xf32>
    %cst_5 = arith.constant dense<0.000000e+00> : vector<16xf32>
    %7 = vector.multi_reduction <add>, %6, %cst_5 [1] : vector<16x32xf32> to vector<16xf32>
    %8 = vector.shape_cast %7 : vector<16xf32> to vector<16x1xf32>
    %cst_6 = arith.constant 3.200000e+01 : f32
    %9 = vector.broadcast %cst_6 : f32 to vector<16x1xf32>
    %10 = arith.divf %8, %9 : vector<16x1xf32>
    %11 = vector.broadcast %10 : vector<16x1xf32> to vector<16x32xf32>
    %12 = arith.subf %6, %11 : vector<16x32xf32>
    %13 = arith.mulf %12, %12 : vector<16x32xf32>
    %cst_7 = arith.constant dense<0.000000e+00> : vector<16xf32>
    %14 = vector.multi_reduction <add>, %13, %cst_7 [1] : vector<16x32xf32> to vector<16xf32>
    %15 = vector.shape_cast %14 : vector<16xf32> to vector<16x1xf32>
    %cst_8 = arith.constant 3.200000e+01 : f32
    %16 = vector.broadcast %cst_8 : f32 to vector<16x1xf32>
    %17 = arith.divf %15, %16 : vector<16x1xf32>
    %18 = vector.broadcast %10 : vector<16x1xf32> to vector<16x32xf32>
    %19 = arith.subf %6, %18 : vector<16x32xf32>
    %cst_9 = arith.constant 9.99999974E-6 : f32
    %20 = vector.broadcast %cst_9 : f32 to vector<16x1xf32>
    %21 = arith.addf %17, %20 : vector<16x1xf32>
    %22 = math.rsqrt %21 : vector<16x1xf32>
    %23 = vector.broadcast %22 : vector<16x1xf32> to vector<16x32xf32>
    %24 = arith.mulf %19, %23 : vector<16x32xf32>
    %c0_10 = arith.constant 0 : index
    %c0_11 = arith.constant 0 : index
    %25 = vector.load %arg4[%c0_10, %c0_11] : memref<1x32xf32, #tpu.memory_space<vmem>>, vector<1x32xf32>
    %26 = vector.broadcast %25 : vector<1x32xf32> to vector<16x32xf32>
    %27 = arith.mulf %24, %26 : vector<16x32xf32>
    %c0_12 = arith.constant 0 : index
    %c0_13 = arith.constant 0 : index
    %28 = vector.load %arg5[%c0_12, %c0_13] : memref<1x32xf32, #tpu.memory_space<vmem>>, vector<1x32xf32>
    %29 = vector.broadcast %28 : vector<1x32xf32> to vector<16x32xf32>
    %30 = arith.addf %27, %29 : vector<16x32xf32>
    %c0_14 = arith.constant 0 : index
    %c0_15 = arith.constant 0 : index
    %31 = vector.load %arg7[%c0_14, %c0_15] : memref<16x32xf32, #tpu.memory_space<vmem>>, vector<16x32xf32>
    tpu.vector_store %arg7[%c0_14, %c0_15], %30 {strides = array<i32>} : memref<16x32xf32, #tpu.memory_space<vmem>>, vector<16x32xf32>,
    return
  }
  func.func @transform_0(%arg0: i32) -> (i32, i32) {
    %c0_i32 = arith.constant 0 : i32
    %c0_i32_0 = arith.constant 0 : i32
    return %arg0, %c0_i32 : i32, i32
  }
  func.func @transform_1(%arg0: i32) -> (i32, i32) {
    %c0_i32 = arith.constant 0 : i32
    %c0_i32_0 = arith.constant 0 : i32
    %c0_i32_1 = arith.constant 0 : i32
    return %c0_i32, %c0_i32_0 : i32, i32
  }
  func.func @transform_2(%arg0: i32) -> (i32, i32) {
    %c0_i32 = arith.constant 0 : i32
    %c0_i32_0 = arith.constant 0 : i32
    %c0_i32_1 = arith.constant 0 : i32
    return %c0_i32, %c0_i32_0 : i32, i32
  }
  func.func @transform_3(%arg0: i32) -> (i32, i32) {
    %c0_i32 = arith.constant 0 : i32
    %c0_i32_0 = arith.constant 0 : i32
    %c0_i32_1 = arith.constant 0 : i32
    return %c0_i32, %c0_i32_0 : i32, i32
  }
  func.func @transform_4(%arg0: i32) -> (i32, i32) {
    %c0_i32 = arith.constant 0 : i32
    %c0_i32_0 = arith.constant 0 : i32
    %c0_i32_1 = arith.constant 0 : i32
    return %c0_i32, %c0_i32_0 : i32, i32
  }
  func.func @transform_5(%arg0: i32) -> (i32, i32) {
    %c0_i32 = arith.constant 0 : i32
    %c0_i32_0 = arith.constant 0 : i32
    return %arg0, %c0_i32 : i32, i32
  }
  func.func @transform_6(%arg0: i32) -> (i32, i32) {
    %c0_i32 = arith.constant 0 : i32
    %c0_i32_0 = arith.constant 0 : i32
    return %arg0, %c0_i32 : i32, i32
  }
}

</mosaic_0001>

<llo_original>
// kernel: tpu_custom_call.1
$region0: #{tpu_custom_call.1}
  #allocation0 [shape = 'u32[]', space=smem, size = 0x4, offset = 0x4, fixed_abs, tag = 'smem constant byte address 0x4 - core index']
  #allocation1 [shape = 'u32[144,128]{1,0:T(1,128)}', space=vmem, size = 0x12000, scoped, tag = 'internal scratch']
  %s0 = inlined_call_operand.hbm [shape: f32[16,32], index: 0, kind: input, shape index: {}]
  %s1 = inlined_call_operand.hbm [shape: f32[32,32], index: 1, kind: input, shape index: {}]
  %s2 = inlined_call_operand.vmem [shape: f32[1,32], index: 2, kind: input, shape index: {}]
  %s3 = inlined_call_operand.vmem [shape: f32[1,32], index: 3, kind: input, shape index: {}]
  %s4 = inlined_call_operand.vmem [shape: f32[1,32], index: 4, kind: input, shape index: {}]
  %s5 = inlined_call_operand.hbm [shape: f32[16,32], index: 5, kind: input, shape index: {}]
  %s6 = inlined_call_operand.hbm [shape: f32[16,32], index: 6, kind: output, shape index: {}]
  %s7 = sld [smem:[#allocation0]]
  $region46: #{tpu_custom_call.1} parent=0
    _
  %s9 = ssub.s32 1, %s7
  %s10 = scalar_select 0, %s9, %s7
  $region1: #{tpu_custom_call.1} parent=0
    #allocation2 [shape = 'u8[8192]{0}', space=vmem, size = 0x2000, scoped, tag = 'input window, operand 0, single buffered']
    #allocation3 [shape = 's32[1]{0}', space=sflag, size = 0x4, scoped, tag = 'scoped memory for tpu_custom_call.1']
    #allocation4 [shape = 's32[1]{0}', space=sflag, size = 0x4, scoped, tag = 'scoped memory for tpu_custom_call.1']
    #allocation5 [shape = 'u8[16384]{0}', space=vmem, size = 0x4000, scoped, tag = 'input window, operand 1, single buffered']
    #allocation6 [shape = 's32[1]{0}', space=sflag, size = 0x4, scoped, tag = 'scoped memory for tpu_custom_call.1']
    #allocation7 [shape = 'u8[8192]{0}', space=vmem, size = 0x2000, scoped, tag = 'input window, operand 5, single buffered']
    #allocation8 [shape = 'u8[8192]{0}', space=vmem, size = 0x2000, scoped, tag = 'output window, operand 0, single buffered']
    %11 = vsyncpa [#allocation3], 0
    %12 = vsyncpa [#allocation6], 0
    %13 = vsyncpa [#allocation4], 0
    // Predicated region
    $region2: #{tpu_custom_call.1} parent=1 // pred_check
      _
    $region3: #{tpu_custom_call.1} parent=1 // pred_check_branch
      %15 = sbr.rel (0) target = $region5
    $region4: #{tpu_custom_call.1} parent=1 // pred_region
      %s17 = ssub.s32 256, 256
      %18 = vsyncadd [#allocation3], %s17
      %s19 = sshll.u32 [#allocation2], 4
      %s20 = int_to_ptr.vmem [resolvable:$true] %s19
      %25 = dma.hbm_to_vmem [thread:$0]  %s0, 256, %s20, [#allocation3], 128, 128, 8
    $region5: #{tpu_custom_call.1} parent=1 // pred_fallthru
      _
    // Predicated region
    $region6: #{tpu_custom_call.1} parent=1 // pred_check
      _
    $region7: #{tpu_custom_call.1} parent=1 // pred_check_branch
      %27 = sbr.rel (0) target = $region9
    $region8: #{tpu_custom_call.1} parent=1 // pred_region
      %s29 = ssub.s32 512, 512
      %30 = vsyncadd [#allocation6], %s29
      %s31 = sshll.u32 [#allocation5], 4
      %s32 = int_to_ptr.vmem [resolvable:$true] %s31
      %37 = dma.hbm_to_vmem [thread:$0]  %s1, 512, %s32, [#allocation6], 128, 128, 8
    $region9: #{tpu_custom_call.1} parent=1 // pred_fallthru
      _
    // Predicated region
    $region10: #{tpu_custom_call.1} parent=1 // pred_check
      _
    $region11: #{tpu_custom_call.1} parent=1 // pred_check_branch
      %39 = sbr.rel (0) target = $region13
    $region12: #{tpu_custom_call.1} parent=1 // pred_region
      _
    $region13: #{tpu_custom_call.1} parent=1 // pred_fallthru
      _
    // Predicated region
    $region14: #{tpu_custom_call.1} parent=1 // pred_check
      _
    $region15: #{tpu_custom_call.1} parent=1 // pred_check_branch
      %41 = sbr.rel (0) target = $region17
    $region16: #{tpu_custom_call.1} parent=1 // pred_region
      _
    $region17: #{tpu_custom_call.1} parent=1 // pred_fallthru
      _
    // Predicated region
    $region18: #{tpu_custom_call.1} parent=1 // pred_check
      _
    $region19: #{tpu_custom_call.1} parent=1 // pred_check_branch
      %43 = sbr.rel (0) target = $region21
    $region20: #{tpu_custom_call.1} parent=1 // pred_region
      _
    $region21: #{tpu_custom_call.1} parent=1 // pred_fallthru
      _
    // Predicated region
    $region22: #{tpu_custom_call.1} parent=1 // pred_check
      _
    $region23: #{tpu_custom_call.1} parent=1 // pred_check_branch
      %45 = sbr.rel (0) target = $region25
    $region24: #{tpu_custom_call.1} parent=1 // pred_region
      %s47 = ssub.s32 256, 256
      %48 = vsyncadd [#allocation6], %s47
      %s49 = sshll.u32 [#allocation7], 4
      %s50 = int_to_ptr.vmem [resolvable:$true] %s49
      %55 = dma.hbm_to_vmem [thread:$0]  %s5, 256, %s50, [#allocation6], 128, 128, 8
    $region25: #{tpu_custom_call.1} parent=1 // pred_fallthru
      _
    // Predicated region
    $region26: #{tpu_custom_call.1} parent=1 // pred_check
      _
    $region27: #{tpu_custom_call.1} parent=1 // pred_check_branch
      %57 = sbr.rel (0) target = $region29
    $region28: #{tpu_custom_call.1} parent=1 // pred_region
      %58 = dma.done [#allocation3], 256
    $region29: #{tpu_custom_call.1} parent=1 // pred_fallthru
      _
    // Predicated region
    $region30: #{tpu_custom_call.1} parent=1 // pred_check
      _
    $region31: #{tpu_custom_call.1} parent=1 // pred_check_branch
      %60 = sbr.rel (0) target = $region33
    $region32: #{tpu_custom_call.1} parent=1 // pred_region
      %61 = dma.done [#allocation6], 512
    $region33: #{tpu_custom_call.1} parent=1 // pred_fallthru
      _
    // Predicated region
    $region34: #{tpu_custom_call.1} parent=1 // pred_check
      _
    $region35: #{tpu_custom_call.1} parent=1 // pred_check_branch
      %63 = sbr.rel (0) target = $region37
    $region36: #{tpu_custom_call.1} parent=1 // pred_region
      %64 = dma.done [#allocation6], 256
    $region37: #{tpu_custom_call.1} parent=1 // pred_fallthru
      _
    %v65 = vld [vmem:[#allocation2] sm:$0xff]
    %v66 = vld [vmem:[#allocation2 + $0x8] sm:$0xff]
    %v67 = vld [vmem:[#allocation5] sm:$0xff]
    %v68 = vld [vmem:[#allocation5 + $0x8] sm:$0xff]
    %v69 = vld [vmem:[#allocation5 + $0x10] sm:$0xff]
    %v70 = vld [vmem:[#allocation5 + $0x18] sm:$0xff]
    %v71 = vld [vmem:[%s2] sm:$0x1]
    %v73 = vlaneseq
    %v74 = vshrl.u32 %v73, 7
    %v75 = vsub.s32 0, %v74
    %v76 = vrot.slane %v71, %v75
    %vm78 = vcmask 261120
    %v80 = vsel %vm78, %v65, 0
    %v83 = vsel %vm78, %v66, 0
    %85 = vmatprep.subr.mxu0 0.0
    %86 = vmatpush1.msra.mxu0 0.0
    %87 = vmatprep.subr.mxu0 0.0
    %88 = vmatpush1.msra.mxu0 0.0
    %89 = vmatprep.subr.mxu0 0.0
    %90 = vmatpush1.msra.mxu0 0.0
    %91 = vmatprep.subr.mxu0 0.0
    %92 = vmatpush1.msra.mxu0 0.0
    %93 = vmatprep.subr.mxu0 0.0
    %94 = vmatpush1.msra.mxu0 0.0
    %95 = vmatprep.subr.mxu0 0.0
    %96 = vmatpush1.msra.mxu0 0.0
    %97 = vmatprep.subr.mxu0 0.0
    %98 = vmatpush1.msra.mxu0 0.0
    %99 = vmatprep.subr.mxu0 0.0
    %100 = vmatpush1.msra.mxu0 0.0
    %101 = vmatprep.subr.mxu0 0.0
    %102 = vmatpush1.msra.mxu0 0.0
    %103 = vmatprep.subr.mxu0 0.0
    %104 = vmatpush1.msra.mxu0 0.0
    %105 = vmatprep.subr.mxu0 0.0
    %106 = vmatpush1.msra.mxu0 0.0
    %107 = vmatprep.subr.mxu0 0.0
    %108 = vmatpush1.msra.mxu0 0.0
    %109 = vmatprep.subr.mxu0 0.0
    %110 = vmatpush1.msra.mxu0 %v70
    %111 = vmatprep.subr.mxu0 0.0
    %112 = vmatpush1.msra.mxu0 %v69
    %113 = vmatprep.subr.mxu0 0.0
    %114 = vmatpush1.msra.mxu0 %v68
    %115 = vmatprep.subr.mxu0 0.0
    %116 = vmatpush1.msra.mxu0 %v67
    %117 = vmatprep.subr.mxu0 0.0
    %118 = vmatpush2.msra.mxu0 0.0
    %119 = vmatprep.subr.mxu0 0.0
    %120 = vmatpush2.msra.mxu0 0.0
    %121 = vmatprep.subr.mxu0 0.0
    %122 = vmatpush2.msra.mxu0 0.0
    %123 = vmatprep.subr.mxu0 0.0
    %124 = vmatpush2.msra.mxu0 0.0
    %125 = vmatprep.subr.mxu0 0.0
    %126 = vmatpush2.msra.mxu0 0.0
    %127 = vmatprep.subr.mxu0 0.0
    %128 = vmatpush2.msra.mxu0 0.0
    %129 = vmatprep.subr.mxu0 0.0
    %130 = vmatpush2.msra.mxu0 0.0
    %131 = vmatprep.subr.mxu0 0.0
    %132 = vmatpush2.msra.mxu0 0.0
    %133 = vmatprep.subr.mxu0 0.0
    %134 = vmatpush2.msra.mxu0 0.0
    %135 = vmatprep.subr.mxu0 0.0
    %136 = vmatpush2.msra.mxu0 0.0
    %137 = vmatprep.subr.mxu0 0.0
    %138 = vmatpush2.msra.mxu0 0.0
    %139 = vmatprep.subr.mxu0 0.0
    %140 = vmatpush2.msra.mxu0 0.0
    %141 = vmatprep.subr.mxu0 0.0
    %142 = vmatpush2.msra.mxu0 0.0
    %143 = vmatprep.subr.mxu0 0.0
    %144 = vmatpush2.msra.mxu0 0.0
    %145 = vmatprep.subr.mxu0 0.0
    %146 = vmatpush2.msra.mxu0 0.0
    %147 = vmatprep.subr.mxu0 0.0
    %148 = vmatpush2.msra.mxu0 0.0
    %149 = vmatprep.mubr.f32.mxu0 0.0
    %150 = vmatmul.mubr.f32.gmra.mxu0 %v80
    %v151 = vpop.f32.mrf.mxu0
    %v152 = vadd.f32 %v76, %v151
    %v153 = vpop.f32.mrf.mxu0
    %154 = vmatprep.mubr.f32.mxu0 0.0
    %155 = vmatmul.mubr.f32.gmra.mxu0 %v83
    %v156 = vpop.f32.mrf.mxu0
    %v157 = vadd.f32 %v76, %v156
    %v158 = vpop.f32.mrf.mxu0
    %159 = vdwg.mxu0
    %v160 = vadd.f32 %v65, %v152
    %v161 = vadd.f32 %v66, %v157
    %v162 = vsel %vm78, %v160, 0.0
    %163 = vadd.xlane.f32.xlu0 %v162
    %v164 = vpop.xlane.xlu0 %163
    %v165 = vsel %vm78, %v161, 0.0
    %166 = vadd.xlane.f32.xlu0 %v165
    %v167 = vpop.xlane.xlu0 %166
    %v168 = vrcp.pop 32.0
    %v169 = vmul.f32 %v164, %v168
    %v170 = vmul.f32 %v167, %v168
    %v171 = vsub.f32 %v160, %v169
    %v172 = vsub.f32 %v161, %v170
    %v173 = vmul.f32 %v171, %v171
    %v174 = vmul.f32 %v172, %v172
    %v175 = vsel %vm78, %v173, 0.0
    %176 = vadd.xlane.f32.xlu0 %v175
    %v177 = vpop.xlane.xlu0 %176
    %v178 = vsel %vm78, %v174, 0.0
    %179 = vadd.xlane.f32.xlu0 %v178
    %v180 = vpop.xlane.xlu0 %179
    %v181 = vmul.f32 %v177, %v168
    %v182 = vmul.f32 %v180, %v168
    %v183 = vadd.f32 %v181, 1e-05
    %v184 = vadd.f32 %v182, 1e-05
    %v185 = vrsqrt.pop %v183
    %v186 = vrsqrt.pop %v184
    %v187 = vmul.f32 %v171, %v185
    %v188 = vmul.f32 %v172, %v186
    %v189 = vld [vmem:[%s3] sm:$0x1]
    %v191 = vlaneseq
    %v192 = vshrl.u32 %v191, 7
    %v193 = vsub.s32 0, %v192
    %v194 = vrot.slane %v189, %v193
    %v196 = vmul.f32 %v187, %v194
    %v197 = vmul.f32 %v188, %v194
    %v198 = vld [vmem:[%s4] sm:$0x1]
    %v200 = vlaneseq
    %v201 = vshrl.u32 %v200, 7
    %v202 = vsub.s32 0, %v201
    %v203 = vrot.slane %v198, %v202
    %v205 = vadd.f32 %v196, %v203
    %v206 = vadd.f32 %v197, %v203
    %207 = vst.msk [vmem:[#allocation8] sm:$0xff] %vm78, %v205
    %208 = vst.msk [vmem:[#allocation8 + $0x8] sm:$0xff] %vm78, %v206
    // Predicated region
    $region38: #{tpu_custom_call.1} parent=1 // pred_check
      _
    $region39: #{tpu_custom_call.1} parent=1 // pred_check_branch
      %210 = sbr.rel (0) target = $region41
    $region40: #{tpu_custom_call.1} parent=1 // pred_region
      %s212 = ssub.s32 256, 256
      %213 = vsyncadd [#allocation4], %s212
      %s214 = sshll.u32 [#allocation8], 4
      %s215 = int_to_ptr.vmem [resolvable:$true] %s214
      %220 = dma.vmem_to_hbm [thread:$0]  %s215, 256, %s6, [#allocation4], 128, 128, 8
    $region41: #{tpu_custom_call.1} parent=1 // pred_fallthru
      _
    // Predicated region
    $region42: #{tpu_custom_call.1} parent=1 // pred_check
      _
    $region43: #{tpu_custom_call.1} parent=1 // pred_check_branch
      %222 = sbr.rel (0) target = $region45
    $region44: #{tpu_custom_call.1} parent=1 // pred_region
      %223 = dma.done [#allocation4], 256
    $region45: #{tpu_custom_call.1} parent=1 // pred_fallthru
      _
    %224 = vsyncpa [#allocation3], 1
    %225 = vsyncpa [#allocation6], 1
    %226 = vsyncpa [#allocation4], 1

</llo_original>
